<compile_context>
chip_gen: v7x
topology: tpu7x:2x2x1
jax: 0.10.0
libtpu: 0.0.40
codegen_flags: <defaults>
</compile_context>

<pallas_src>
import functools
import math

import jax
import jax.numpy as jnp
from jax import lax
from jax.experimental import pallas as pl
from jax.experimental.pallas import tpu as pltpu

LANE = 128    # TPU lane width; hidden dims are zero-padded to multiples of this.
CHUNK = 1024  # inner compute chunk (rows); bounds f32 intermediates to ~0.5 MiB/stage.


def _round_up(a, b):
    return -(-a // b) * b


def _default_config():
    """(tile_m, vmem_limit_bytes) budgeted per TPU generation."""
    try:
        vmem_bytes = pltpu.get_tpu_info().vmem_capacity_bytes
    except Exception:
        vmem_bytes = 64 * 1024 * 1024  # conservative (v7x-sized) fallback
    if vmem_bytes >= 96 * 1024 * 1024:
        # v5e / v6e: 128 MiB physical VMEM.
        return 8192, 64 * 1024 * 1024
    # v7x: 64 MiB per TensorCore -> smaller tile, leave headroom below physical.
    return 4096, 48 * 1024 * 1024


def _select_tile(m, tile_m):
    """Pick (tile, chunk): tile = DMA/pipeline block rows, chunk = inner compute rows."""
    if m <= CHUNK:
        t = _round_up(max(m, 8), 8)
        return t, t
    tile = min(tile_m, m)
    tile = max(CHUNK, (tile // CHUNK) * CHUNK)        # multiple of the chunk size
    if m <= tile:
        # Keep >= 2 grid steps: megacore sharding on v7x, DMA/compute overlap everywhere.
        tile = max(CHUNK, _round_up(pl.cdiv(m, 2), CHUNK))
    return tile, CHUNK


def dnn_kernel(x_ref, w1_ref, b1_ref, w2_ref, b2_ref, w3_ref, b3_ref,
               w4_ref, b4_ref, o_ref, *, num_chunks, chunk):
    # Weights/biases are loop-invariant: load once, reuse across row chunks.
    w1 = w1_ref[...]
    b1 = b1_ref[...]
    w2 = w2_ref[...]
    b2 = b2_ref[...]
    w3 = w3_ref[...]
    b3 = b3_ref[...]
    w4 = w4_ref[...]
    b4 = b4_ref[...]

    def process_chunk(c):
        r = pl.multiple_of(c * chunk, 8)
        # Cast the row chunk to bf16 in-kernel (no-op if x is already bf16); every
        # matmul accumulates in f32 on the MXU.
        x = x_ref[pl.ds(r, chunk), :].astype(jnp.bfloat16)

        h = jnp.dot(x, w1, preferred_element_type=jnp.float32)
        h = jnp.maximum(h + b1, 0.0).astype(jnp.bfloat16)

        h = jnp.dot(h, w2, preferred_element_type=jnp.float32)
        h = jnp.maximum(h + b2, 0.0).astype(jnp.bfloat16)

        h = jnp.dot(h, w3, preferred_element_type=jnp.float32)
        h = jnp.maximum(h + b3, 0.0).astype(jnp.bfloat16)

        logits = jnp.dot(h, w4, preferred_element_type=jnp.float32) + b4
        o_ref[pl.ds(r, chunk), :] = jax.nn.sigmoid(logits).astype(o_ref.dtype)

    if num_chunks == 1:
        process_chunk(0)
    else:
        def body(c, carry):
            process_chunk(c)
            return carry
        lax.fori_loop(0, num_chunks, body, 0, unroll=False)


@functools.partial(jax.jit,
                   static_argnames=("tile_m", "vmem_limit_bytes", "out_dtype"))
def _dnn_forward_impl(x, padded_params, tile_m, vmem_limit_bytes, out_dtype):
    assert x.ndim > 2, "Check the input shape for DNN"
    w1, b1, w2, b2, w3, b3, w4, b4 = padded_params
    in_dim = w1.shape[0]
    out_dim = w4.shape[1]

    lead_shape = x.shape[:-1]
    m = math.prod(lead_shape)
    x2 = x.reshape(m, in_dim)

    tile, chunk = _select_tile(m, tile_m)
    num_chunks = tile // chunk
    grid = (pl.cdiv(m, tile),)  # partial last block handled by Pallas (no jnp.pad)

    kernel = functools.partial(dnn_kernel, num_chunks=num_chunks, chunk=chunk)

    def row_map(i):
        return (i, 0)

    def full_map(i):
        return (0, 0)  # constant block index -> weights stay resident in VMEM

    out2 = pl.pallas_call(
        kernel,
        out_shape=jax.ShapeDtypeStruct((m, out_dim), out_dtype),
        grid_spec=pltpu.PrefetchScalarGridSpec(
            num_scalar_prefetch=0,
            grid=grid,
            in_specs=[
                pl.BlockSpec((tile, in_dim), row_map),   # x row tile
                pl.BlockSpec(w1.shape, full_map),
                pl.BlockSpec(b1.shape, full_map),
                pl.BlockSpec(w2.shape, full_map),
                pl.BlockSpec(b2.shape, full_map),
                pl.BlockSpec(w3.shape, full_map),
                pl.BlockSpec(b3.shape, full_map),
                pl.BlockSpec(w4.shape, full_map),
                pl.BlockSpec(b4.shape, full_map),
            ],
            out_specs=pl.BlockSpec((tile, out_dim), row_map),
        ),
        compiler_params=pltpu.CompilerParams(
            dimension_semantics=("parallel",),
            vmem_limit_bytes=vmem_limit_bytes,
        ),
    )(x2, w1, b1, w2, b2, w3, b3, w4, b4)

    return out2.reshape(*lead_shape, out_dim)


def dnn_forward(x, padded_params, tile_m=None, vmem_limit_bytes=None, out_dtype=None):
    """x: (..., input_dim) with ndim > 2; padded_params from prepare_params()."""
    if tile_m is None or vmem_limit_bytes is None:
        d_tile, d_vmem = _default_config()
        tile_m = d_tile if tile_m is None else tile_m
        vmem_limit_bytes = d_vmem if vmem_limit_bytes is None else vmem_limit_bytes
    if out_dtype is None:
        out_dtype = x.dtype  # preserve module semantics (f32 in -> f32 out)
    return _dnn_forward_impl(x, padded_params, tile_m, vmem_limit_bytes,
                             jnp.dtype(out_dtype))


def init_params(key, input_dim, output_dim, hidden_dim=64):
    """Deterministic synthetic init (PyTorch-Linear-style uniform ranges), f32."""
    dims = [(input_dim, hidden_dim),
            (hidden_dim, hidden_dim // 2),
            (hidden_dim // 2, hidden_dim // 4),
            (hidden_dim // 4, output_dim)]
    params = []
    for (fan_in, fan_out) in dims:
        key, kw, kb = jax.random.split(key, 3)
        bound = 1.0 / (fan_in ** 0.5)
        # stored as (in, out) so the kernel does x @ W
        w = jax.random.uniform(kw, (fan_in, fan_out), jnp.float32, -bound, bound)
        b = jax.random.uniform(kb, (1, fan_out), jnp.float32, -bound, bound)
        params.extend([w, b])
    return tuple(params)


def prepare_params(params):
    """Zero-pad hidden widths to 128 lanes and cast weights to bf16 (done once;
    mathematically identical: ReLU(h@0 + 0) == 0 in the padded lanes)."""
    w1, b1, w2, b2, w3, b3, w4, b4 = params
    in_dim = w1.shape[0]
    out_dim = w4.shape[1]
    h1 = _round_up(w1.shape[1], LANE)
    h2 = _round_up(w2.shape[1], LANE)
    h3 = _round_up(w3.shape[1], LANE)

    def pad2(a, rows, cols):
        return jnp.pad(a, ((0, rows - a.shape[0]), (0, cols - a.shape[1])))

    w1p = pad2(w1, in_dim, h1).astype(jnp.bfloat16)
    b1p = pad2(b1, 1, h1)                              # bias stays f32
    w2p = pad2(w2, h1, h2).astype(jnp.bfloat16)
    b2p = pad2(b2, 1, h2)
    w3p = pad2(w3, h2, h3).astype(jnp.bfloat16)
    b3p = pad2(b3, 1, h3)
    w4p = pad2(w4, h3, out_dim).astype(jnp.bfloat16)
    b4p = b4                                           # (1, out_dim) f32, unpadded
    return (w1p, b1p, w2p, b2p, w3p, b3p, w4p, b4p)


def reference_forward(x, params):
    """Pure-JAX f32 reference of the PyTorch forward (for sanity check)."""
    w1, b1, w2, b2, w3, b3, w4, b4 = params
    h = jnp.maximum(x @ w1 + b1, 0.0)
    h = jnp.maximum(h @ w2 + b2, 0.0)
    h = jnp.maximum(h @ w3 + b3, 0.0)
    return jax.nn.sigmoid(h @ w4 + b4)


if __name__ == "__main__":
    key = jax.random.PRNGKey(0)
    batch, seq, input_dim, hidden_dim, output_dim = 2, 8, 32, 64, 4

    kx, kx2, kx3, kp = jax.random.split(key, 4)
    x = jax.random.normal(kx, (batch, seq, input_dim), jnp.float32)
    params = init_params(kp, input_dim, output_dim, hidden_dim)
    padded_params = prepare_params(params)

    out = jax.block_until_ready(dnn_forward(x, padded_params))
    ref = reference_forward(x, params)
    assert out.shape == (batch, seq, output_dim)
    assert jnp.allclose(out, ref, atol=2e-2), "mismatch vs reference"

    # Partial-last-block path (m = 3*7 = 21, no wrapper-side padding).
    x_odd = jax.random.normal(kx2, (3, 7, input_dim), jnp.float32)
    out_odd = jax.block_until_ready(dnn_forward(x_odd, padded_params))
    ref_odd = reference_forward(x_odd, params)
    assert out_odd.shape == (3, 7, output_dim)
    assert jnp.allclose(out_odd, ref_odd, atol=2e-2), "mismatch vs reference (partial M)"

    # Multi-step grid + inner chunk loop path (m = 4*600 = 2400 -> 2 grid steps,
    # 2 x 1024-row chunks per tile, masked partial last block).
    x_big = jax.random.normal(kx3, (4, 600, input_dim), jnp.float32)
    out_big = jax.block_until_ready(dnn_forward(x_big, padded_params))
    ref_big = reference_forward(x_big, params)
    assert out_big.shape == (4, 600, output_dim)
    assert jnp.allclose(out_big, ref_big, atol=2e-2), "mismatch vs reference (chunked)"

    print("KERNEL_OK")
</pallas_src>

<mosaic_0001>
module attributes {stable_mosaic.version = 11 : i64} {
  func.func @dnn_kernel(%arg0: i32, %arg1: memref<16x32xf32, #tpu.memory_space<vmem>>, %arg2: memref<32x128xbf16, #tpu.memory_space<vmem>>, %arg3: memref<1x128xf32, #tpu.memory_space<vmem>>, %arg4: memref<128x128xbf16, #tpu.memory_space<vmem>>, %arg5: memref<1x128xf32, #tpu.memory_space<vmem>>, %arg6: memref<128x128xbf16, #tpu.memory_space<vmem>>, %arg7: memref<1x128xf32, #tpu.memory_space<vmem>>, %arg8: memref<128x4xbf16, #tpu.memory_space<vmem>>, %arg9: memref<1x4xf32, #tpu.memory_space<vmem>>, %arg10: memref<16x4xf32, #tpu.memory_space<vmem>>) attributes {dimension_semantics = [#tpu.dimension_semantics<parallel>], iteration_bounds = array<i64: 1>, scalar_prefetch = 0 : i64, scratch_operands = 0 : i64, tpu.core_type = #tpu.core_type<tc>, window_params = [{transform_indices = @transform_0, window_bounds = array<i64: 16, 32>}, {pipeline_mode = #tpu.pipeline_mode<synchronous>, transform_indices = @transform_1, window_bounds = array<i64: 32, 128>}, {pipeline_mode = #tpu.pipeline_mode<synchronous>, transform_indices = @transform_2, window_bounds = array<i64: 1, 128>}, {pipeline_mode = #tpu.pipeline_mode<synchronous>, transform_indices = @transform_3, window_bounds = array<i64: 128, 128>}, {pipeline_mode = #tpu.pipeline_mode<synchronous>, transform_indices = @transform_4, window_bounds = array<i64: 1, 128>}, {pipeline_mode = #tpu.pipeline_mode<synchronous>, transform_indices = @transform_5, window_bounds = array<i64: 128, 128>}, {pipeline_mode = #tpu.pipeline_mode<synchronous>, transform_indices = @transform_6, window_bounds = array<i64: 1, 128>}, {pipeline_mode = #tpu.pipeline_mode<synchronous>, transform_indices = @transform_7, window_bounds = array<i64: 128, 4>}, {pipeline_mode = #tpu.pipeline_mode<synchronous>, transform_indices = @transform_8, window_bounds = array<i64: 1, 4>}, {transform_indices = @transform_9, window_bounds = array<i64: 16, 4>}]} {
    %c0 = arith.constant 0 : index
    %c0_0 = arith.constant 0 : index
    %0 = vector.load %arg2[%c0, %c0_0] : memref<32x128xbf16, #tpu.memory_space<vmem>>, vector<32x128xbf16>
    %c0_1 = arith.constant 0 : index
    %c0_2 = arith.constant 0 : index
    %1 = vector.load %arg3[%c0_1, %c0_2] : memref<1x128xf32, #tpu.memory_space<vmem>>, vector<1x128xf32>
    %c0_3 = arith.constant 0 : index
    %c0_4 = arith.constant 0 : index
    %2 = vector.load %arg4[%c0_3, %c0_4] : memref<128x128xbf16, #tpu.memory_space<vmem>>, vector<128x128xbf16>
    %c0_5 = arith.constant 0 : index
    %c0_6 = arith.constant 0 : index
    %3 = vector.load %arg5[%c0_5, %c0_6] : memref<1x128xf32, #tpu.memory_space<vmem>>, vector<1x128xf32>
    %c0_7 = arith.constant 0 : index
    %c0_8 = arith.constant 0 : index
    %4 = vector.load %arg6[%c0_7, %c0_8] : memref<128x128xbf16, #tpu.memory_space<vmem>>, vector<128x128xbf16>
    %c0_9 = arith.constant 0 : index
    %c0_10 = arith.constant 0 : index
    %5 = vector.load %arg7[%c0_9, %c0_10] : memref<1x128xf32, #tpu.memory_space<vmem>>, vector<1x128xf32>
    %c0_11 = arith.constant 0 : index
    %c0_12 = arith.constant 0 : index
    %6 = vector.load %arg8[%c0_11, %c0_12] : memref<128x4xbf16, #tpu.memory_space<vmem>>, vector<128x4xbf16>
    %c0_13 = arith.constant 0 : index
    %c0_14 = arith.constant 0 : index
    %7 = vector.load %arg9[%c0_13, %c0_14] : memref<1x4xf32, #tpu.memory_space<vmem>>, vector<1x4xf32>
    %c0_i32 = arith.constant 0 : i32
    %8 = tpu.assume_multiple %c0_i32, 8 : i32
    %9 = arith.index_cast %8 : i32 to index
    %c0_15 = arith.constant 0 : index
    %10 = vector.load %arg1[%9, %c0_15] : memref<16x32xf32, #tpu.memory_space<vmem>>, vector<16x32xf32>
    %11 = arith.truncf %10 : vector<16x32xf32> to vector<16x32xbf16>
    %cst = arith.constant dense<0.000000e+00> : vector<16x128xf32>
    %12 = tpu.matmul %11, %0, %cst {dimension_numbers = #tpu.dot_dimension_numbers<[1], [0], [0], [1], [0, 0, 1, 1], [], []>} : vector<16x32xbf16>, vector<32x128xbf16>, vector<16x128xf32> -> vector<16x128xf32>
    %13 = vector.broadcast %1 : vector<1x128xf32> to vector<16x128xf32>
    %14 = arith.addf %12, %13 : vector<16x128xf32>
    %cst_16 = arith.constant 0.000000e+00 : f32
    %15 = vector.broadcast %cst_16 : f32 to vector<16x128xf32>
    %16 = arith.maximumf %14, %15 : vector<16x128xf32>
    %17 = arith.truncf %16 : vector<16x128xf32> to vector<16x128xbf16>
    %cst_17 = arith.constant dense<0.000000e+00> : vector<16x128xf32>
    %18 = tpu.matmul %17, %2, %cst_17 {dimension_numbers = #tpu.dot_dimension_numbers<[1], [0], [0], [1], [0, 0, 1, 1], [], []>} : vector<16x128xbf16>, vector<128x128xbf16>, vector<16x128xf32> -> vector<16x128xf32>
    %19 = vector.broadcast %3 : vector<1x128xf32> to vector<16x128xf32>
    %20 = arith.addf %18, %19 : vector<16x128xf32>
    %cst_18 = arith.constant 0.000000e+00 : f32
    %21 = vector.broadcast %cst_18 : f32 to vector<16x128xf32>
    %22 = arith.maximumf %20, %21 : vector<16x128xf32>
    %23 = arith.truncf %22 : vector<16x128xf32> to vector<16x128xbf16>
    %cst_19 = arith.constant dense<0.000000e+00> : vector<16x128xf32>
    %24 = tpu.matmul %23, %4, %cst_19 {dimension_numbers = #tpu.dot_dimension_numbers<[1], [0], [0], [1], [0, 0, 1, 1], [], []>} : vector<16x128xbf16>, vector<128x128xbf16>, vector<16x128xf32> -> vector<16x128xf32>
    %25 = vector.broadcast %5 : vector<1x128xf32> to vector<16x128xf32>
    %26 = arith.addf %24, %25 : vector<16x128xf32>
    %cst_20 = arith.constant 0.000000e+00 : f32
    %27 = vector.broadcast %cst_20 : f32 to vector<16x128xf32>
    %28 = arith.maximumf %26, %27 : vector<16x128xf32>
    %29 = arith.truncf %28 : vector<16x128xf32> to vector<16x128xbf16>
    %cst_21 = arith.constant dense<0.000000e+00> : vector<16x4xf32>
    %30 = tpu.matmul %29, %6, %cst_21 {dimension_numbers = #tpu.dot_dimension_numbers<[1], [0], [0], [1], [0, 0, 1, 1], [], []>} : vector<16x128xbf16>, vector<128x4xbf16>, vector<16x4xf32> -> vector<16x4xf32>
    %31 = vector.broadcast %7 : vector<1x4xf32> to vector<16x4xf32>
    %32 = arith.addf %30, %31 : vector<16x4xf32>
    %33 = arith.negf %32 : vector<16x4xf32>
    %34 = math.exp %33 : vector<16x4xf32>
    %cst_22 = arith.constant 1.000000e+00 : f32
    %35 = vector.broadcast %cst_22 : f32 to vector<16x4xf32>
    %36 = arith.addf %35, %34 : vector<16x4xf32>
    %37 = arith.divf %35, %36 : vector<16x4xf32>
    %38 = arith.index_cast %8 : i32 to index
    %c0_23 = arith.constant 0 : index
    %39 = vector.load %arg10[%38, %c0_23] : memref<16x4xf32, #tpu.memory_space<vmem>>, vector<16x4xf32>
    tpu.vector_store %arg10[%38, %c0_23], %37 {strides = array<i32>} : memref<16x4xf32, #tpu.memory_space<vmem>>, vector<16x4xf32>,
    return
  }
  func.func @transform_0(%arg0: i32) -> (i32, i32) {
    %c0_i32 = arith.constant 0 : i32
    %c0_i32_0 = arith.constant 0 : i32
    return %arg0, %c0_i32 : i32, i32
  }
  func.func @transform_1(%arg0: i32) -> (i32, i32) {
    %c0_i32 = arith.constant 0 : i32
    %c0_i32_0 = arith.constant 0 : i32
    %c0_i32_1 = arith.constant 0 : i32
    return %c0_i32, %c0_i32_0 : i32, i32
  }
  func.func @transform_2(%arg0: i32) -> (i32, i32) {
    %c0_i32 = arith.constant 0 : i32
    %c0_i32_0 = arith.constant 0 : i32
    %c0_i32_1 = arith.constant 0 : i32
    return %c0_i32, %c0_i32_0 : i32, i32
  }
  func.func @transform_3(%arg0: i32) -> (i32, i32) {
    %c0_i32 = arith.constant 0 : i32
    %c0_i32_0 = arith.constant 0 : i32
    %c0_i32_1 = arith.constant 0 : i32
    return %c0_i32, %c0_i32_0 : i32, i32
  }
  func.func @transform_4(%arg0: i32) -> (i32, i32) {
    %c0_i32 = arith.constant 0 : i32
    %c0_i32_0 = arith.constant 0 : i32
    %c0_i32_1 = arith.constant 0 : i32
    return %c0_i32, %c0_i32_0 : i32, i32
  }
  func.func @transform_5(%arg0: i32) -> (i32, i32) {
    %c0_i32 = arith.constant 0 : i32
    %c0_i32_0 = arith.constant 0 : i32
    %c0_i32_1 = arith.constant 0 : i32
    return %c0_i32, %c0_i32_0 : i32, i32
  }
  func.func @transform_6(%arg0: i32) -> (i32, i32) {
    %c0_i32 = arith.constant 0 : i32
    %c0_i32_0 = arith.constant 0 : i32
    %c0_i32_1 = arith.constant 0 : i32
    return %c0_i32, %c0_i32_0 : i32, i32
  }
  func.func @transform_7(%arg0: i32) -> (i32, i32) {
    %c0_i32 = arith.constant 0 : i32
    %c0_i32_0 = arith.constant 0 : i32
    %c0_i32_1 = arith.constant 0 : i32
    return %c0_i32, %c0_i32_0 : i32, i32
  }
  func.func @transform_8(%arg0: i32) -> (i32, i32) {
    %c0_i32 = arith.constant 0 : i32
    %c0_i32_0 = arith.constant 0 : i32
    %c0_i32_1 = arith.constant 0 : i32
    return %c0_i32, %c0_i32_0 : i32, i32
  }
  func.func @transform_9(%arg0: i32) -> (i32, i32) {
    %c0_i32 = arith.constant 0 : i32
    %c0_i32_0 = arith.constant 0 : i32
    return %arg0, %c0_i32 : i32, i32
  }
}

</mosaic_0001>

<llo_original>
// kernel: _dnn_forward_impl.1
$region0: #{_dnn_forward_impl.1}
  #allocation0 [shape = 'u32[]', space=smem, size = 0x4, offset = 0x4, fixed_abs, tag = 'smem constant byte address 0x4 - core index']
  #allocation1 [shape = 'u32[144,128]{1,0:T(1,128)}', space=vmem, size = 0x12000, scoped, tag = 'internal scratch']
  %s0 = inlined_call_operand.vmem [shape: f32[16,32], index: 0, kind: input, shape index: {}]
  %s1 = inlined_call_operand.hbm [shape: bf16[32,128], index: 1, kind: input, shape index: {}]
  %s2 = inlined_call_operand.vmem [shape: f32[1,128], index: 2, kind: input, shape index: {}]
  %s3 = inlined_call_operand.vmem [shape: bf16[128,128], index: 3, kind: input, shape index: {}]
  %s4 = inlined_call_operand.vmem [shape: f32[1,128], index: 4, kind: input, shape index: {}]
  %s5 = inlined_call_operand.hbm [shape: bf16[128,128], index: 5, kind: input, shape index: {}]
  %s6 = inlined_call_operand.vmem [shape: f32[1,128], index: 6, kind: input, shape index: {}]
  %s7 = inlined_call_operand.vmem [shape: bf16[128,4], index: 7, kind: input, shape index: {}]
  %s8 = inlined_call_operand.vmem [shape: f32[1,4], index: 8, kind: input, shape index: {}]
  %s9 = inlined_call_operand.vmem [shape: f32[16,4], index: 9, kind: output, shape index: {}]
  %s10 = sld [smem:[#allocation0]]
  $region54: #{_dnn_forward_impl.1} parent=0
    _
  %s12 = ssub.s32 1, %s10
  %s13 = scalar_select 0, %s12, %s10
  $region1: #{_dnn_forward_impl.1} parent=0
    #allocation2 [shape = 'u8[8192]{0}', space=vmem, size = 0x2000, scoped, tag = 'input window, operand 1, single buffered']
    #allocation3 [shape = 's32[1]{0}', space=sflag, size = 0x4, scoped, tag = 'scoped memory for _dnn_forward_impl.1']
    #allocation4 [shape = 'u8[32768]{0}', space=vmem, size = 0x8000, scoped, tag = 'input window, operand 5, single buffered']
    #allocation5 [shape = 's32[1]{0}', space=sflag, size = 0x4, scoped, tag = 'scoped memory for _dnn_forward_impl.1']
    %14 = vsyncpa [#allocation3], 0
    %15 = vsyncpa [#allocation5], 0
    // Predicated region
    $region2: #{_dnn_forward_impl.1} parent=1 // pred_check
      _
    $region3: #{_dnn_forward_impl.1} parent=1 // pred_check_branch
      %17 = sbr.rel (0) target = $region5
    $region4: #{_dnn_forward_impl.1} parent=1 // pred_region
      _
    $region5: #{_dnn_forward_impl.1} parent=1 // pred_fallthru
      _
    // Predicated region
    $region6: #{_dnn_forward_impl.1} parent=1 // pred_check
      _
    $region7: #{_dnn_forward_impl.1} parent=1 // pred_check_branch
      %19 = sbr.rel (0) target = $region9
    $region8: #{_dnn_forward_impl.1} parent=1 // pred_region
      %s21 = ssub.s32 256, 256
      %22 = vsyncadd [#allocation3], %s21
      %s23 = sshll.u32 [#allocation2], 4
      %s24 = int_to_ptr.vmem [resolvable:$true] %s23
      %29 = dma.hbm_to_vmem [thread:$0]  %s1, 256, %s24, [#allocation3], 64, 64, 4
    $region9: #{_dnn_forward_impl.1} parent=1 // pred_fallthru
      _
    // Predicated region
    $region10: #{_dnn_forward_impl.1} parent=1 // pred_check
      _
    $region11: #{_dnn_forward_impl.1} parent=1 // pred_check_branch
      %31 = sbr.rel (0) target = $region13
    $region12: #{_dnn_forward_impl.1} parent=1 // pred_region
      _
    $region13: #{_dnn_forward_impl.1} parent=1 // pred_fallthru
      _
    // Predicated region
    $region14: #{_dnn_forward_impl.1} parent=1 // pred_check
      _
    $region15: #{_dnn_forward_impl.1} parent=1 // pred_check_branch
      %33 = sbr.rel (0) target = $region17
    $region16: #{_dnn_forward_impl.1} parent=1 // pred_region
      _
    $region17: #{_dnn_forward_impl.1} parent=1 // pred_fallthru
      _
    // Predicated region
    $region18: #{_dnn_forward_impl.1} parent=1 // pred_check
      _
    $region19: #{_dnn_forward_impl.1} parent=1 // pred_check_branch
      %35 = sbr.rel (0) target = $region21
    $region20: #{_dnn_forward_impl.1} parent=1 // pred_region
      _
    $region21: #{_dnn_forward_impl.1} parent=1 // pred_fallthru
      _
    // Predicated region
    $region22: #{_dnn_forward_impl.1} parent=1 // pred_check
      _
    $region23: #{_dnn_forward_impl.1} parent=1 // pred_check_branch
      %37 = sbr.rel (0) target = $region25
    $region24: #{_dnn_forward_impl.1} parent=1 // pred_region
      %s39 = ssub.s32 1024, 1024
      %40 = vsyncadd [#allocation5], %s39
      %s41 = sshll.u32 [#allocation4], 4
      %s42 = int_to_ptr.vmem [resolvable:$true] %s41
      %47 = dma.hbm_to_vmem [thread:$0]  %s5, 1024, %s42, [#allocation5], 64, 64, 4
    $region25: #{_dnn_forward_impl.1} parent=1 // pred_fallthru
      _
    // Predicated region
    $region26: #{_dnn_forward_impl.1} parent=1 // pred_check
      _
    $region27: #{_dnn_forward_impl.1} parent=1 // pred_check_branch
      %49 = sbr.rel (0) target = $region29
    $region28: #{_dnn_forward_impl.1} parent=1 // pred_region
      _
    $region29: #{_dnn_forward_impl.1} parent=1 // pred_fallthru
      _
    // Predicated region
    $region30: #{_dnn_forward_impl.1} parent=1 // pred_check
      _
    $region31: #{_dnn_forward_impl.1} parent=1 // pred_check_branch
      %51 = sbr.rel (0) target = $region33
    $region32: #{_dnn_forward_impl.1} parent=1 // pred_region
      _
    $region33: #{_dnn_forward_impl.1} parent=1 // pred_fallthru
      _
    // Predicated region
    $region34: #{_dnn_forward_impl.1} parent=1 // pred_check
      _
    $region35: #{_dnn_forward_impl.1} parent=1 // pred_check_branch
      %53 = sbr.rel (0) target = $region37
    $region36: #{_dnn_forward_impl.1} parent=1 // pred_region
      _
    $region37: #{_dnn_forward_impl.1} parent=1 // pred_fallthru
      _
    // Predicated region
    $region38: #{_dnn_forward_impl.1} parent=1 // pred_check
      _
    $region39: #{_dnn_forward_impl.1} parent=1 // pred_check_branch
      %55 = sbr.rel (0) target = $region41
    $region40: #{_dnn_forward_impl.1} parent=1 // pred_region
      %56 = dma.done [#allocation3], 256
    $region41: #{_dnn_forward_impl.1} parent=1 // pred_fallthru
      _
    // Predicated region
    $region42: #{_dnn_forward_impl.1} parent=1 // pred_check
      _
    $region43: #{_dnn_forward_impl.1} parent=1 // pred_check_branch
      %58 = sbr.rel (0) target = $region45
    $region44: #{_dnn_forward_impl.1} parent=1 // pred_region
      %59 = dma.done [#allocation5], 1024
    $region45: #{_dnn_forward_impl.1} parent=1 // pred_fallthru
      _
    %v61 = vld [vmem:[#allocation2] sm:$0xf]
    %v62 = vld [vmem:[#allocation2 + $0x4] sm:$0xf]
    %v63 = vld [vmem:[#allocation2 + $0x8] sm:$0xf]
    %v64 = vld [vmem:[#allocation2 + $0xc] sm:$0xf]
    %v65 = vld [vmem:[%s2] sm:$0x1]
    %v66 = vld [vmem:[%s3] sm:$0xf]
    %v67 = vld [vmem:[%s3 + $0x4] sm:$0xf]
    %v68 = vld [vmem:[%s3 + $0x8] sm:$0xf]
    %v69 = vld [vmem:[%s3 + $0xc] sm:$0xf]
    %v70 = vld [vmem:[%s3 + $0x10] sm:$0xf]
    %v71 = vld [vmem:[%s3 + $0x14] sm:$0xf]
    %v72 = vld [vmem:[%s3 + $0x18] sm:$0xf]
    %v73 = vld [vmem:[%s3 + $0x1c] sm:$0xf]
    %v74 = vld [vmem:[%s3 + $0x20] sm:$0xf]
    %v75 = vld [vmem:[%s3 + $0x24] sm:$0xf]
    %v76 = vld [vmem:[%s3 + $0x28] sm:$0xf]
    %v77 = vld [vmem:[%s3 + $0x2c] sm:$0xf]
    %v78 = vld [vmem:[%s3 + $0x30] sm:$0xf]
    %v79 = vld [vmem:[%s3 + $0x34] sm:$0xf]
    %v80 = vld [vmem:[%s3 + $0x38] sm:$0xf]
    %v81 = vld [vmem:[%s3 + $0x3c] sm:$0xf]
    %v82 = vld [vmem:[%s4] sm:$0x1]
    %v83 = vld [vmem:[#allocation4] sm:$0xf]
    %v84 = vld [vmem:[#allocation4 + $0x4] sm:$0xf]
    %v85 = vld [vmem:[#allocation4 + $0x8] sm:$0xf]
    %v86 = vld [vmem:[#allocation4 + $0xc] sm:$0xf]
    %v87 = vld [vmem:[#allocation4 + $0x10] sm:$0xf]
    %v88 = vld [vmem:[#allocation4 + $0x14] sm:$0xf]
    %v89 = vld [vmem:[#allocation4 + $0x18] sm:$0xf]
    %v90 = vld [vmem:[#allocation4 + $0x1c] sm:$0xf]
    %v91 = vld [vmem:[#allocation4 + $0x20] sm:$0xf]
    %v92 = vld [vmem:[#allocation4 + $0x24] sm:$0xf]
    %v93 = vld [vmem:[#allocation4 + $0x28] sm:$0xf]
    %v94 = vld [vmem:[#allocation4 + $0x2c] sm:$0xf]
    %v95 = vld [vmem:[#allocation4 + $0x30] sm:$0xf]
    %v96 = vld [vmem:[#allocation4 + $0x34] sm:$0xf]
    %v97 = vld [vmem:[#allocation4 + $0x38] sm:$0xf]
    %v98 = vld [vmem:[#allocation4 + $0x3c] sm:$0xf]
    %v99 = vld [vmem:[%s6] sm:$0x1]
    %v100 = vld [vmem:[%s7] sm:$0xf]
    %v101 = vld [vmem:[%s7 + $0x4] sm:$0xf]
    %v102 = vld [vmem:[%s7 + $0x8] sm:$0xf]
    %v103 = vld [vmem:[%s7 + $0xc] sm:$0xf]
    %v104 = vld [vmem:[%s7 + $0x10] sm:$0xf]
    %v105 = vld [vmem:[%s7 + $0x14] sm:$0xf]
    %v106 = vld [vmem:[%s7 + $0x18] sm:$0xf]
    %v107 = vld [vmem:[%s7 + $0x1c] sm:$0xf]
    %v108 = vld [vmem:[%s7 + $0x20] sm:$0xf]
    %v109 = vld [vmem:[%s7 + $0x24] sm:$0xf]
    %v110 = vld [vmem:[%s7 + $0x28] sm:$0xf]
    %v111 = vld [vmem:[%s7 + $0x2c] sm:$0xf]
    %v112 = vld [vmem:[%s7 + $0x30] sm:$0xf]
    %v113 = vld [vmem:[%s7 + $0x34] sm:$0xf]
    %v114 = vld [vmem:[%s7 + $0x38] sm:$0xf]
    %v115 = vld [vmem:[%s7 + $0x3c] sm:$0xf]
    %v116 = vld [vmem:[%s8] sm:$0x1]
    %v117 = vld [vmem:[%s0] sm:$0xff]
    %v118 = vld [vmem:[%s0 + $0x8] sm:$0xff]
    %v119 = vpack.c.bf16 %v118, %v117
    %v121 = vlaneseq
    %v122 = vshrl.u32 %v121, 7
    %v123 = vsub.s32 0, %v122
    %v124 = vrot.slane %v65, %v123
    %v130 = vunpack.c.l.b16 %v61
    %v131 = vunpack.c.l.b16 %v62
    %v132 = vunpack.c.l.b16 %v63
    %v133 = vunpack.c.l.b16 %v64
    %v134 = vpack.c.b16 %v131, %v130
    %v135 = vpack.c.b16 %v133, %v132
    %vm138 = vcmask 261120
    %v140 = vsel %vm138, %v119, 0
    %142 = vmatprep.subr.bf16.mxu0 0
    %143 = vmatpush1.bf16.msra.mxu0 %v134
    %144 = vmatprep.subr.bf16.mxu0 0
    %145 = vmatpush1.bf16.msra.mxu0 %v135
    %146 = vmatprep.subr.bf16.mxu0 0
    %147 = vmatpush1.bf16.msra.mxu0 0
    %148 = vmatprep.subr.bf16.mxu0 0
    %149 = vmatpush1.bf16.msra.mxu0 0
    %150 = vmatprep.subr.bf16.mxu0 0
    %151 = vmatpush1.bf16.msra.mxu0 0
    %152 = vmatprep.subr.bf16.mxu0 0
    %153 = vmatpush1.bf16.msra.mxu0 0
    %154 = vmatprep.subr.bf16.mxu0 0
    %155 = vmatpush1.bf16.msra.mxu0 0
    %156 = vmatprep.subr.bf16.mxu0 0
    %157 = vmatpush1.bf16.msra.mxu0 0
    %158 = vmatprep.subr.bf16.mxu0 0
    %159 = vmatpush1.bf16.msra.mxu0 0
    %160 = vmatprep.subr.bf16.mxu0 0
    %161 = vmatpush1.bf16.msra.mxu0 0
    %162 = vmatprep.subr.bf16.mxu0 0
    %163 = vmatpush1.bf16.msra.mxu0 0
    %164 = vmatprep.subr.bf16.mxu0 0
    %165 = vmatpush1.bf16.msra.mxu0 0
    %166 = vmatprep.subr.bf16.mxu0 0
    %167 = vmatpush1.bf16.msra.mxu0 0
    %168 = vmatprep.subr.bf16.mxu0 0
    %169 = vmatpush1.bf16.msra.mxu0 0
    %170 = vmatprep.subr.bf16.mxu0 0
    %171 = vmatpush1.bf16.msra.mxu0 0
    %172 = vmatprep.subr.bf16.mxu0 0
    %173 = vmatpush1.bf16.msra.mxu0 0
    %174 = vmatprep.mubr.bf16.mxu0 0
    %175 = vmatmul.mubr.bf16.gmra.mrb[0].mxu0 %v140
    %v176 = vpop.f32.mrb[0].mxu0
    %v177 = vadd.f32 %v124, %v176
    %v178 = vpop.f32.mrb[0].mxu0
    %v179 = vpop.f32.mrb[0].mxu0
    %v180 = vadd.f32 %v124, %v179
    %v181 = vpop.f32.mrb[0].mxu0
    %182 = vdwg.mxu0
    %v183 = vmax.f32 %v177, 0.0
    %v184 = vmax.f32 %v180, 0.0
    %v185 = vpack.c.bf16 %v184, %v183
    %v187 = vlaneseq
    %v188 = vshrl.u32 %v187, 7
    %v189 = vsub.s32 0, %v188
    %v190 = vrot.slane %v82, %v189
    %v208 = vunpack.c.l.b16 %v66
    %v209 = vunpack.c.l.b16 %v67
    %v210 = vunpack.c.l.b16 %v68
    %v211 = vunpack.c.l.b16 %v69
    %v212 = vunpack.c.l.b16 %v70
    %v213 = vunpack.c.l.b16 %v71
    %v214 = vunpack.c.l.b16 %v72
    %v215 = vunpack.c.l.b16 %v73
    %v216 = vunpack.c.l.b16 %v74
    %v217 = vunpack.c.l.b16 %v75
    %v218 = vunpack.c.l.b16 %v76
    %v219 = vunpack.c.l.b16 %v77
    %v220 = vunpack.c.l.b16 %v78
    %v221 = vunpack.c.l.b16 %v79
    %v222 = vunpack.c.l.b16 %v80
    %v223 = vunpack.c.l.b16 %v81
    %v224 = vpack.c.b16 %v209, %v208
    %v225 = vpack.c.b16 %v211, %v210
    %v226 = vpack.c.b16 %v213, %v212
    %v227 = vpack.c.b16 %v215, %v214
    %v228 = vpack.c.b16 %v217, %v216
    %v229 = vpack.c.b16 %v219, %v218
    %v230 = vpack.c.b16 %v221, %v220
    %v231 = vpack.c.b16 %v223, %v222
    %240 = vmatprep.subr.bf16.mxu0 0
    %241 = vmatpush1.bf16.msra.mxu0 %v224
    %242 = vmatprep.subr.bf16.mxu0 0
    %243 = vmatpush1.bf16.msra.mxu0 %v225
    %244 = vmatprep.subr.bf16.mxu0 0
    %245 = vmatpush1.bf16.msra.mxu0 %v226
    %246 = vmatprep.subr.bf16.mxu0 0
    %247 = vmatpush1.bf16.msra.mxu0 %v227
    %248 = vmatprep.subr.bf16.mxu0 0
    %249 = vmatpush1.bf16.msra.mxu0 %v228
    %250 = vmatprep.subr.bf16.mxu0 0
    %251 = vmatpush1.bf16.msra.mxu0 %v229
    %252 = vmatprep.subr.bf16.mxu0 0
    %253 = vmatpush1.bf16.msra.mxu0 %v230
    %254 = vmatprep.subr.bf16.mxu0 0
    %255 = vmatpush1.bf16.msra.mxu0 %v231
    %256 = vmatprep.subr.bf16.mxu0 0
    %257 = vmatpush1.bf16.msra.mxu0 0
    %258 = vmatprep.subr.bf16.mxu0 0
    %259 = vmatpush1.bf16.msra.mxu0 0
    %260 = vmatprep.subr.bf16.mxu0 0
    %261 = vmatpush1.bf16.msra.mxu0 0
    %262 = vmatprep.subr.bf16.mxu0 0
    %263 = vmatpush1.bf16.msra.mxu0 0
    %264 = vmatprep.subr.bf16.mxu0 0
    %265 = vmatpush1.bf16.msra.mxu0 0
    %266 = vmatprep.subr.bf16.mxu0 0
    %267 = vmatpush1.bf16.msra.mxu0 0
    %268 = vmatprep.subr.bf16.mxu0 0
    %269 = vmatpush1.bf16.msra.mxu0 0
    %270 = vmatprep.subr.bf16.mxu0 0
    %271 = vmatpush1.bf16.msra.mxu0 0
    %272 = vmatprep.mubr.bf16.mxu0 0
    %273 = vmatmul.mubr.bf16.gmra.mrb[0].mxu0 %v185
    %v274 = vpop.f32.mrb[0].mxu0
    %v275 = vadd.f32 %v190, %v274
    %v276 = vpop.f32.mrb[0].mxu0
    %v277 = vpop.f32.mrb[0].mxu0
    %v278 = vadd.f32 %v190, %v277
    %v279 = vpop.f32.mrb[0].mxu0
    %280 = vdwg.mxu0
    %v281 = vmax.f32 %v275, 0.0
    %v282 = vmax.f32 %v278, 0.0
    %v283 = vpack.c.bf16 %v282, %v281
    %v285 = vlaneseq
    %v286 = vshrl.u32 %v285, 7
    %v287 = vsub.s32 0, %v286
    %v288 = vrot.slane %v99, %v287
    %v306 = vunpack.c.l.b16 %v83
    %v307 = vunpack.c.l.b16 %v84
    %v308 = vunpack.c.l.b16 %v85
    %v309 = vunpack.c.l.b16 %v86
    %v310 = vunpack.c.l.b16 %v87
    %v311 = vunpack.c.l.b16 %v88
    %v312 = vunpack.c.l.b16 %v89
    %v313 = vunpack.c.l.b16 %v90
    %v314 = vunpack.c.l.b16 %v91
    %v315 = vunpack.c.l.b16 %v92
    %v316 = vunpack.c.l.b16 %v93
    %v317 = vunpack.c.l.b16 %v94
    %v318 = vunpack.c.l.b16 %v95
    %v319 = vunpack.c.l.b16 %v96
    %v320 = vunpack.c.l.b16 %v97
    %v321 = vunpack.c.l.b16 %v98
    %v322 = vpack.c.b16 %v307, %v306
    %v323 = vpack.c.b16 %v309, %v308
    %v324 = vpack.c.b16 %v311, %v310
    %v325 = vpack.c.b16 %v313, %v312
    %v326 = vpack.c.b16 %v315, %v314
    %v327 = vpack.c.b16 %v317, %v316
    %v328 = vpack.c.b16 %v319, %v318
    %v329 = vpack.c.b16 %v321, %v320
    %338 = vmatprep.subr.bf16.mxu0 0
    %339 = vmatpush1.bf16.msra.mxu0 %v322
    %340 = vmatprep.subr.bf16.mxu0 0
    %341 = vmatpush1.bf16.msra.mxu0 %v323
    %342 = vmatprep.subr.bf16.mxu0 0
    %343 = vmatpush1.bf16.msra.mxu0 %v324
    %344 = vmatprep.subr.bf16.mxu0 0
    %345 = vmatpush1.bf16.msra.mxu0 %v325
    %346 = vmatprep.subr.bf16.mxu0 0
    %347 = vmatpush1.bf16.msra.mxu0 %v326
    %348 = vmatprep.subr.bf16.mxu0 0
    %349 = vmatpush1.bf16.msra.mxu0 %v327
    %350 = vmatprep.subr.bf16.mxu0 0
    %351 = vmatpush1.bf16.msra.mxu0 %v328
    %352 = vmatprep.subr.bf16.mxu0 0
    %353 = vmatpush1.bf16.msra.mxu0 %v329
    %354 = vmatprep.subr.bf16.mxu0 0
    %355 = vmatpush1.bf16.msra.mxu0 0
    %356 = vmatprep.subr.bf16.mxu0 0
    %357 = vmatpush1.bf16.msra.mxu0 0
    %358 = vmatprep.subr.bf16.mxu0 0
    %359 = vmatpush1.bf16.msra.mxu0 0
    %360 = vmatprep.subr.bf16.mxu0 0
    %361 = vmatpush1.bf16.msra.mxu0 0
    %362 = vmatprep.subr.bf16.mxu0 0
    %363 = vmatpush1.bf16.msra.mxu0 0
    %364 = vmatprep.subr.bf16.mxu0 0
    %365 = vmatpush1.bf16.msra.mxu0 0
    %366 = vmatprep.subr.bf16.mxu0 0
    %367 = vmatpush1.bf16.msra.mxu0 0
    %368 = vmatprep.subr.bf16.mxu0 0
    %369 = vmatpush1.bf16.msra.mxu0 0
    %370 = vmatprep.mubr.bf16.mxu0 0
    %371 = vmatmul.mubr.bf16.gmra.mrb[0].mxu0 %v283
    %v372 = vpop.f32.mrb[0].mxu0
    %v373 = vadd.f32 %v288, %v372
    %v374 = vpop.f32.mrb[0].mxu0
    %v375 = vpop.f32.mrb[0].mxu0
    %v376 = vadd.f32 %v288, %v375
    %v377 = vpop.f32.mrb[0].mxu0
    %378 = vdwg.mxu0
    %v379 = vmax.f32 %v373, 0.0
    %v380 = vmax.f32 %v376, 0.0
    %v381 = vpack.c.bf16 %v380, %v379
    %v383 = vlaneseq
    %v384 = vshrl.u32 %v383, 7
    %v385 = vsub.s32 0, %v384
    %v386 = vrot.slane %v116, %v385
    %v404 = vunpack.c.l.b16 %v100
    %v405 = vunpack.c.l.b16 %v101
    %v406 = vunpack.c.l.b16 %v102
    %v407 = vunpack.c.l.b16 %v103
    %v408 = vunpack.c.l.b16 %v104
    %v409 = vunpack.c.l.b16 %v105
    %v410 = vunpack.c.l.b16 %v106
    %v411 = vunpack.c.l.b16 %v107
    %v412 = vunpack.c.l.b16 %v108
    %v413 = vunpack.c.l.b16 %v109
    %v414 = vunpack.c.l.b16 %v110
    %v415 = vunpack.c.l.b16 %v111
    %v416 = vunpack.c.l.b16 %v112
    %v417 = vunpack.c.l.b16 %v113
    %v418 = vunpack.c.l.b16 %v114
    %v419 = vunpack.c.l.b16 %v115
    %v420 = vpack.c.b16 %v405, %v404
    %v421 = vpack.c.b16 %v407, %v406
    %v422 = vpack.c.b16 %v409, %v408
    %v423 = vpack.c.b16 %v411, %v410
    %v424 = vpack.c.b16 %v413, %v412
    %v425 = vpack.c.b16 %v415, %v414
    %v426 = vpack.c.b16 %v417, %v416
    %v427 = vpack.c.b16 %v419, %v418
    %436 = vmatprep.subr.bf16.mxu0 0
    %437 = vmatpush1.bf16.msra.mxu0 %v420
    %438 = vmatprep.subr.bf16.mxu0 0
    %439 = vmatpush1.bf16.msra.mxu0 %v421
    %440 = vmatprep.subr.bf16.mxu0 0
    %441 = vmatpush1.bf16.msra.mxu0 %v422
    %442 = vmatprep.subr.bf16.mxu0 0
    %443 = vmatpush1.bf16.msra.mxu0 %v423
    %444 = vmatprep.subr.bf16.mxu0 0
    %445 = vmatpush1.bf16.msra.mxu0 %v424
    %446 = vmatprep.subr.bf16.mxu0 0
    %447 = vmatpush1.bf16.msra.mxu0 %v425
    %448 = vmatprep.subr.bf16.mxu0 0
    %449 = vmatpush1.bf16.msra.mxu0 %v426
    %450 = vmatprep.subr.bf16.mxu0 0
    %451 = vmatpush1.bf16.msra.mxu0 %v427
    %452 = vmatprep.subr.bf16.mxu0 0
    %453 = vmatpush1.bf16.msra.mxu0 0
    %454 = vmatprep.subr.bf16.mxu0 0
    %455 = vmatpush1.bf16.msra.mxu0 0
    %456 = vmatprep.subr.bf16.mxu0 0
    %457 = vmatpush1.bf16.msra.mxu0 0
    %458 = vmatprep.subr.bf16.mxu0 0
    %459 = vmatpush1.bf16.msra.mxu0 0
    %460 = vmatprep.subr.bf16.mxu0 0
    %461 = vmatpush1.bf16.msra.mxu0 0
    %462 = vmatprep.subr.bf16.mxu0 0
    %463 = vmatpush1.bf16.msra.mxu0 0
    %464 = vmatprep.subr.bf16.mxu0 0
    %465 = vmatpush1.bf16.msra.mxu0 0
    %466 = vmatprep.subr.bf16.mxu0 0
    %467 = vmatpush1.bf16.msra.mxu0 0
    %468 = vmatprep.mubr.bf16.mxu0 0
    %469 = vmatmul.mubr.bf16.gmra.mrb[0].mxu0 %v381
    %v470 = vpop.f32.mrb[0].mxu0
    %v471 = vadd.f32 %v386, %v470
    %v472 = vpop.f32.mrb[0].mxu0
    %v473 = vpop.f32.mrb[0].mxu0
    %v474 = vadd.f32 %v386, %v473
    %v475 = vpop.f32.mrb[0].mxu0
    %476 = vdwg.mxu0
    %v477 = vxor.u32 %v471, 2147483648
    %v478 = vxor.u32 %v474, 2147483648
    %v479 = vmul.f32 %v477, 1.442695
    %v480 = vpow.pop %v479
    %v481 = vmul.f32 %v478, 1.442695
    %v482 = vpow.pop %v481
    %v483 = vadd.f32 %v480, 1.0
    %v484 = vadd.f32 %v482, 1.0
    %v485 = vrcp.pop %v483
    %v486 = vmul.f32 1.0, %v485
    %v487 = vrcp.pop %v484
    %v488 = vmul.f32 1.0, %v487
    %vm489 = vcmask 31744
    %490 = vst.msk [vmem:[%s9] sm:$0xff] %vm489, %v486
    %491 = vst.msk [vmem:[%s9 + $0x8] sm:$0xff] %vm489, %v488
    // Predicated region
    $region46: #{_dnn_forward_impl.1} parent=1 // pred_check
      _
    $region47: #{_dnn_forward_impl.1} parent=1 // pred_check_branch
      %493 = sbr.rel (0) target = $region49
    $region48: #{_dnn_forward_impl.1} parent=1 // pred_region
      _
    $region49: #{_dnn_forward_impl.1} parent=1 // pred_fallthru
      _
    // Predicated region
    $region50: #{_dnn_forward_impl.1} parent=1 // pred_check
      _
    $region51: #{_dnn_forward_impl.1} parent=1 // pred_check_branch
      %495 = sbr.rel (0) target = $region53
    $region52: #{_dnn_forward_impl.1} parent=1 // pred_region
      _
    $region53: #{_dnn_forward_impl.1} parent=1 // pred_fallthru
      _
    %496 = vsyncpa [#allocation3], 1
    %497 = vsyncpa [#allocation5], 1

</llo_original>
